<compile_context>
chip_gen: v7x
topology: tpu7x:2x2x1
jax: 0.10.0
libtpu: 0.0.40
codegen_flags: <defaults>
</compile_context>

<pallas_src>
import functools

import jax
import jax.numpy as jnp
from jax.experimental import pallas as pl
from jax.experimental.pallas import tpu as pltpu


def _round_up(x, m):
    return (x + m - 1) // m * m


def _pad2d(x, rows, cols):
    r, c = x.shape
    if r == rows and c == cols:
        return x
    return jnp.pad(x, ((0, rows - r), (0, cols - c)))


def _vmem_limit(tile_bytes):
    # Size the scoped-VMEM request from the actual tile footprint (plus slack)
    # instead of a flat large number: keeps headroom on v7x's 64 MiB VMEM.
    return int(min(max(2 * tile_bytes, 4 * 1024 * 1024), 32 * 1024 * 1024))


# ---------------------------------------------------------------------------
# Pallas kernel 1: linear projection with fused bias + L2 normalization
# ---------------------------------------------------------------------------
def _linear_norm_kernel(x_ref, w_ref, b_ref, o_ref, *, eps):
    """One (row-block, k-block) step of  y = l2norm(x @ w + b, axis=-1).

    The output block is resident across the k axis, so partial products are
    accumulated directly into o_ref (no acc scratch / epilogue copy).  The
    bias is folded into the k==0 write and the L2 normalization into the
    last-k epilogue (requires the full feature dim in one tile).
    """
    k = pl.program_id(1)
    partial = jnp.dot(x_ref[...], w_ref[...], preferred_element_type=jnp.float32)

    @pl.when(k == 0)
    def _():
        o_ref[...] = b_ref[...] + partial

    @pl.when(k != 0)
    def _():
        o_ref[...] += partial

    @pl.when(k == pl.num_programs(1) - 1)
    def _():
        y = o_ref[...]
        ss = jnp.sum(y * y, axis=-1, keepdims=True)
        # x / max(||x||, eps) == x * rsqrt(max(||x||^2, eps^2)); rsqrt -> EUP.
        o_ref[...] = y * jax.lax.rsqrt(jnp.maximum(ss, eps * eps))


def pallas_linear_l2norm(x, w, b, *, tm_max=256, tk_max=1024, eps=1e-12):
    """l2_normalize(x @ w + b, axis=-1) with x:[M,K], w:[K,D], b:[1,D] (f32).

    Returns the PADDED result [round_up(M,tm), round_up(D,128)] f32 with unit
    rows; callers consume padded blocks directly (no unpad slice / extra HBM
    round trip).  Padded feature lanes are exactly zero (w/b zero-padded).
    """
    m, k = x.shape
    k2, d = w.shape
    assert k == k2
    d_p = _round_up(d, 128)
    # The fused normalization needs the full feature dim in a single tile.
    # TODO(synk): tile the feature dim (two-pass normalize) for D > 1024.
    assert d_p <= 1024, "fused L2-normalize epilogue assumes D fits one tile"

    tm = min(tm_max, _round_up(m, 16))        # 16 rows: bf16 sublane packing
    tk = min(tk_max, _round_up(k, 128))
    m_p = _round_up(m, tm)
    k_p = _round_up(k, tk)

    x_p = _pad2d(x.astype(jnp.bfloat16), m_p, k_p)
    w_p = _pad2d(w.astype(jnp.bfloat16), k_p, d_p)
    b_p = _pad2d(b.astype(jnp.float32), 1, d_p)

    grid = (m_p // tm, k_p // tk)

    tile_bytes = (2 * tm * tk * 2            # x blocks (double-buffered, bf16)
                  + 2 * tk * d_p * 2         # w blocks (double-buffered, bf16)
                  + 2 * d_p * 4              # bias
                  + 2 * tm * d_p * 4)        # resident output block
    cost = pl.CostEstimate(
        flops=2 * m_p * k_p * d_p,
        transcendentals=m_p,                 # one rsqrt per output row
        bytes_accessed=(2 * m_p * k_p + 2 * k_p * d_p * grid[0]
                        + 4 * d_p * grid[0] + 4 * m_p * d_p),
    )

    return pl.pallas_call(
        functools.partial(_linear_norm_kernel, eps=eps),
        out_shape=jax.ShapeDtypeStruct((m_p, d_p), jnp.float32),
        grid_spec=pltpu.PrefetchScalarGridSpec(
            num_scalar_prefetch=0,
            grid=grid,
            in_specs=[
                pl.BlockSpec((tm, tk), lambda i, kk: (i, kk)),
                pl.BlockSpec((tk, d_p), lambda i, kk: (kk, 0)),
                pl.BlockSpec((1, d_p), lambda i, kk: (0, 0)),
            ],
            out_specs=pl.BlockSpec((tm, d_p), lambda i, kk: (i, 0)),
        ),
        compiler_params=pltpu.CompilerParams(
            dimension_semantics=("parallel", "arbitrary"),
            vmem_limit_bytes=_vmem_limit(tile_bytes),
        ),
        cost_estimate=cost,
    )(x_p, w_p, b_p)


# ---------------------------------------------------------------------------
# Pallas kernel 2: triplet hinge matrix (inputs already L2-normalized)
# ---------------------------------------------------------------------------
def _triplet_hinge_kernel(a_ref, p_ref, neg_ref, hinge_ref, *, margin):
    """One negatives tile: hinge[b, n] = max(0, dist_ap[b] - dist_an[b,n] + m).

    All inputs are already L2-normalized by the linear kernel.  Each grid step
    writes an independent lane-dense hinge block, so the grid axis over
    negative tiles is fully parallel; the tiny mean reduction happens in JAX
    (slicing the valid window there also replaces every padding mask).
    """
    a = a_ref[...]                                            # [Bp, D] f32
    p = p_ref[...]
    dist_ap = 1.0 - jnp.sum(a * p, axis=-1, keepdims=True)    # [Bp, 1]
    # Cosine similarity against this negatives tile; bf16 MXU operands with
    # f32 accumulation.  Row-major [tn, D] negatives, contracted last-vs-last
    # (the on-chip transpose lands on the otherwise idle XLU).
    sim = jax.lax.dot_general(
        a.astype(jnp.bfloat16), neg_ref[...].astype(jnp.bfloat16),
        dimension_numbers=(((1,), (1,)), ((), ())),
        preferred_element_type=jnp.float32)                   # [Bp, tn]
    # dist_an = 1 - sim;  hinge = max(0, dist_ap - dist_an + margin)
    hinge_ref[...] = jnp.maximum(dist_ap - 1.0 + sim + margin, 0.0)


def pallas_triplet_hinge(anchor_n, positive_n, negatives_n, b_rows, *, margin,
                         tn_max=512):
    """Hinge matrix [b_rows, N_p] of the cosine margin-ranking loss.

    anchor_n / positive_n: padded, L2-normalized [*, D_p] (>= b_rows rows).
    negatives_n: padded, L2-normalized [N_p, D_p] (N_p % tile == 0).
    """
    d_p = anchor_n.shape[1]
    b_p = b_rows
    n_p = negatives_n.shape[0]
    tn = min(tn_max, n_p)
    assert n_p % tn == 0
    grid = (n_p // tn,)

    tile_bytes = (2 * b_p * d_p * 4 * 2      # anchor + positive blocks
                  + 2 * tn * d_p * 4         # negatives blocks (double-buffered)
                  + 2 * b_p * tn * 4)        # hinge output blocks
    cost = pl.CostEstimate(
        flops=2 * b_p * d_p * n_p + 4 * b_p * d_p * grid[0],
        transcendentals=0,
        bytes_accessed=4 * (2 * b_p * d_p * grid[0] + n_p * d_p + b_p * n_p),
    )

    return pl.pallas_call(
        functools.partial(_triplet_hinge_kernel, margin=float(margin)),
        out_shape=jax.ShapeDtypeStruct((b_p, n_p), jnp.float32),
        grid_spec=pltpu.PrefetchScalarGridSpec(
            num_scalar_prefetch=0,
            grid=grid,
            in_specs=[
                pl.BlockSpec((b_p, d_p), lambda j: (0, 0)),
                pl.BlockSpec((b_p, d_p), lambda j: (0, 0)),
                pl.BlockSpec((tn, d_p), lambda j: (j, 0)),
            ],
            out_specs=pl.BlockSpec((b_p, tn), lambda j: (0, j)),
        ),
        compiler_params=pltpu.CompilerParams(
            dimension_semantics=("parallel",),
            vmem_limit_bytes=_vmem_limit(tile_bytes),
        ),
        cost_estimate=cost,
    )(anchor_n, positive_n, negatives_n)


# ---------------------------------------------------------------------------
# Stand-in CLIP model (deterministic synthetic parameters)
# ---------------------------------------------------------------------------
def init_params(key, vocab_size, tok_dim, img_feat_dim, embed_dim):
    k1, k2, k3, k4, k5 = jax.random.split(key, 5)
    return {
        "tok_emb": 0.02 * jax.random.normal(k1, (vocab_size, tok_dim), jnp.float32),
        "txt_w": 0.02 * jax.random.normal(k2, (tok_dim, embed_dim), jnp.float32),
        "txt_b": 0.01 * jax.random.normal(k4, (1, embed_dim), jnp.float32),
        "img_w": 0.02 * jax.random.normal(k3, (img_feat_dim, embed_dim), jnp.float32),
        "img_b": 0.01 * jax.random.normal(k5, (1, embed_dim), jnp.float32),
    }


def encode_text(params, input_ids):
    # TODO(synk): real EVA02-CLIP text transformer (pretrained open_clip
    # weights) replaced by embedding lookup + mean-pool + Pallas linear+norm.
    tok = jnp.take(params["tok_emb"], input_ids, axis=0)        # [B, L, tok_dim]
    pooled = jnp.mean(tok, axis=1)                              # [B, tok_dim]
    return pallas_linear_l2norm(pooled, params["txt_w"], params["txt_b"])


def encode_images(params, images_nchw):
    # TODO(synk): real EVA02 ViT image tower replaced by flatten + Pallas
    # linear+norm projection.
    m = images_nchw.shape[0]
    flat = images_nchw.reshape(m, -1).astype(jnp.float32)       # [M, C*H*W]
    return pallas_linear_l2norm(flat, params["img_w"], params["img_b"])


def triplet_forward(params, anchor_input_ids, positive_image, negative_images,
                    margin=0.2):
    """Mirror of EVA02CLIPForTriplet.forward; returns (loss, None)."""
    b = positive_image.shape[0]
    negatives = jnp.concatenate(negative_images, axis=0)        # [N, C, H, W]
    n = negatives.shape[0]

    anchor_n = encode_text(params, anchor_input_ids)            # [B_p', D_p] unit rows
    # Positive + negative projections fused into one call (img_w read once).
    all_images = jnp.concatenate([positive_image, negatives], axis=0)
    img_n = encode_images(params, all_images)                   # [M_p, D_p] unit rows

    d_p = img_n.shape[1]
    b_p = _round_up(b, 16)
    tn = min(512, _round_up(n, 128))
    n_p = _round_up(n, tn)
    # Remaining small glue: row-slice the N real negatives out of the fused
    # image output and zero-pad them to a fixed tile multiple (fixed shapes
    # also avoid recompiles when the ragged negative count changes).
    negatives_n = _pad2d(img_n[b:b + n], n_p, d_p)

    hinge = pallas_triplet_hinge(anchor_n, img_n, negatives_n, b_p,
                                 margin=margin)                 # [b_p, n_p]
    # Final tiny reduction in JAX; slicing the valid [B, N] window replaces
    # all in-kernel padding masks.  MarginRankingLoss(margin)(ap, an, -1)
    # == mean over B*N of max(0, ap - an + margin).
    loss = jnp.sum(hinge[:b, :n]) / (b * n)
    return loss, None


# ---------------------------------------------------------------------------
# Plain-JAX reference (same numeric recipe: bf16 MXU operands, f32 elsewhere)
# ---------------------------------------------------------------------------
def _ref_forward(params, anchor_input_ids, positive_image, negative_images,
                 margin=0.2):
    def lin_norm(x, w, b):
        y = jnp.dot(x.astype(jnp.bfloat16), w.astype(jnp.bfloat16),
                    preferred_element_type=jnp.float32) + b
        nrm = jnp.sqrt(jnp.sum(y * y, axis=-1, keepdims=True))
        return y / jnp.maximum(nrm, 1e-12)

    tok = jnp.take(params["tok_emb"], anchor_input_ids, axis=0)
    a = lin_norm(jnp.mean(tok, axis=1), params["txt_w"], params["txt_b"])
    p = lin_norm(positive_image.reshape(positive_image.shape[0], -1),
                 params["img_w"], params["img_b"])
    negs = jnp.concatenate(negative_images, axis=0)
    nn = lin_norm(negs.reshape(negs.shape[0], -1),
                  params["img_w"], params["img_b"])
    dist_ap = 1.0 - jnp.sum(a * p, axis=-1, keepdims=True)       # [B, 1]
    sim = jnp.dot(a.astype(jnp.bfloat16), nn.astype(jnp.bfloat16).T,
                  preferred_element_type=jnp.float32)            # [B, N]
    dist_an = 1.0 - sim
    return jnp.mean(jnp.maximum(dist_ap - dist_an + margin, 0.0))


# ---------------------------------------------------------------------------
if __name__ == "__main__":
    B, L = 2, 8
    C, H, W = 4, 16, 16                        # img_feat_dim = 1024
    VOCAB, TOK_DIM, EMBED_DIM = 64, 128, 128   # lane-dense dims
    MARGIN = 0.2

    key = jax.random.PRNGKey(0)
    k_par, k_ids, k_pos, k_n1, k_n2 = jax.random.split(key, 5)

    params = init_params(k_par, VOCAB, TOK_DIM, C * H * W, EMBED_DIM)

    anchor_input_ids = jax.random.randint(k_ids, (B, L), 0, VOCAB, jnp.int32)
    positive_image = jax.random.normal(k_pos, (B, C, H, W), jnp.float32)
    # List of negative image tensors with different K per element (K1=1, K2=2)
    negative_images = [
        jax.random.normal(k_n1, (1, C, H, W), jnp.float32),
        jax.random.normal(k_n2, (2, C, H, W), jnp.float32),
    ]

    fwd = jax.jit(functools.partial(triplet_forward, margin=MARGIN))
    loss, _ = fwd(params, anchor_input_ids, positive_image, negative_images)
    loss = jax.block_until_ready(loss)

    ref = _ref_forward(params, anchor_input_ids, positive_image,
                       negative_images, margin=MARGIN)
    # bf16 MXU operands (linear + cosine matmuls) + rsqrt normalize -> relaxed
    # tolerance vs the f32 elementwise reference path.
    assert jnp.allclose(loss, ref, atol=2e-3, rtol=2e-3), (loss, ref)

    print("KERNEL_OK")
</pallas_src>

<mosaic_0001>
module attributes {stable_mosaic.version = 11 : i64} {
  func.func @_linear_norm_kernel(%arg0: i32, %arg1: i32, %arg2: memref<16x128xbf16, #tpu.memory_space<vmem>>, %arg3: memref<128x128xbf16, #tpu.memory_space<vmem>>, %arg4: memref<1x128xf32, #tpu.memory_space<vmem>>, %arg5: memref<16x128xf32, #tpu.memory_space<vmem>>) attributes {dimension_semantics = [#tpu.dimension_semantics<parallel>, #tpu.dimension_semantics<arbitrary>], iteration_bounds = array<i64: 1, 1>, scalar_prefetch = 0 : i64, scratch_operands = 0 : i64, tpu.core_type = #tpu.core_type<tc>, window_params = [{transform_indices = @transform_0, window_bounds = array<i64: 16, 128>}, {transform_indices = @transform_1, window_bounds = array<i64: 128, 128>}, {pipeline_mode = #tpu.pipeline_mode<synchronous>, transform_indices = @transform_2, window_bounds = array<i64: 1, 128>}, {transform_indices = @transform_3, window_bounds = array<i64: 16, 128>}]} {
    %c0 = arith.constant 0 : index
    %c0_0 = arith.constant 0 : index
    %0 = vector.load %arg2[%c0, %c0_0] : memref<16x128xbf16, #tpu.memory_space<vmem>>, vector<16x128xbf16>
    %c0_1 = arith.constant 0 : index
    %c0_2 = arith.constant 0 : index
    %1 = vector.load %arg3[%c0_1, %c0_2] : memref<128x128xbf16, #tpu.memory_space<vmem>>, vector<128x128xbf16>
    %cst = arith.constant dense<0.000000e+00> : vector<16x128xf32>
    %2 = tpu.matmul %0, %1, %cst {dimension_numbers = #tpu.dot_dimension_numbers<[1], [0], [0], [1], [0, 0, 1, 1], [], []>} : vector<16x128xbf16>, vector<128x128xbf16>, vector<16x128xf32> -> vector<16x128xf32>
    %c0_i32 = arith.constant 0 : i32
    %3 = arith.cmpi eq, %arg1, %c0_i32 : i32
    %4 = arith.extui %3 : i1 to i32
    %c0_i32_3 = arith.constant 0 : i32
    %5 = arith.cmpi ne, %4, %c0_i32_3 : i32
    scf.if %5 {
      %c0_8 = arith.constant 0 : index
      %c0_9 = arith.constant 0 : index
      %12 = vector.load %arg4[%c0_8, %c0_9] : memref<1x128xf32, #tpu.memory_space<vmem>>, vector<1x128xf32>
      %13 = vector.broadcast %12 : vector<1x128xf32> to vector<16x128xf32>
      %14 = arith.addf %13, %2 : vector<16x128xf32>
      %c0_10 = arith.constant 0 : index
      %c0_11 = arith.constant 0 : index
      %15 = vector.load %arg5[%c0_10, %c0_11] : memref<16x128xf32, #tpu.memory_space<vmem>>, vector<16x128xf32>
      tpu.vector_store %arg5[%c0_10, %c0_11], %14 {strides = array<i32>} : memref<16x128xf32, #tpu.memory_space<vmem>>, vector<16x128xf32>,
    } else {
    }
    %c0_i32_4 = arith.constant 0 : i32
    %6 = arith.cmpi ne, %arg1, %c0_i32_4 : i32
    %7 = arith.extui %6 : i1 to i32
    %c0_i32_5 = arith.constant 0 : i32
    %8 = arith.cmpi ne, %7, %c0_i32_5 : i32
    scf.if %8 {
      %c0_8 = arith.constant 0 : index
      %c0_9 = arith.constant 0 : index
      %12 = vector.load %arg5[%c0_8, %c0_9] : memref<16x128xf32, #tpu.memory_space<vmem>>, vector<16x128xf32>
      %13 = arith.addf %12, %2 : vector<16x128xf32>
      %c0_10 = arith.constant 0 : index
      %c0_11 = arith.constant 0 : index
      %14 = vector.load %arg5[%c0_10, %c0_11] : memref<16x128xf32, #tpu.memory_space<vmem>>, vector<16x128xf32>
      tpu.vector_store %arg5[%c0_10, %c0_11], %13 {strides = array<i32>} : memref<16x128xf32, #tpu.memory_space<vmem>>, vector<16x128xf32>,
    } else {
    }
    %c0_i32_6 = arith.constant 0 : i32
    %9 = arith.cmpi eq, %arg1, %c0_i32_6 : i32
    %10 = arith.extui %9 : i1 to i32
    %c0_i32_7 = arith.constant 0 : i32
    %11 = arith.cmpi ne, %10, %c0_i32_7 : i32
    scf.if %11 {
      %c0_8 = arith.constant 0 : index
      %c0_9 = arith.constant 0 : index
      %12 = vector.load %arg5[%c0_8, %c0_9] : memref<16x128xf32, #tpu.memory_space<vmem>>, vector<16x128xf32>
      %13 = arith.mulf %12, %12 : vector<16x128xf32>
      %cst_10 = arith.constant dense<0.000000e+00> : vector<16xf32>
      %14 = vector.multi_reduction <add>, %13, %cst_10 [1] : vector<16x128xf32> to vector<16xf32>
      %15 = vector.shape_cast %14 : vector<16xf32> to vector<16x1xf32>
      %cst_11 = arith.constant 1.000000e-24 : f32
      %16 = vector.broadcast %cst_11 : f32 to vector<16x1xf32>
      %17 = arith.maximumf %15, %16 : vector<16x1xf32>
      %18 = math.rsqrt %17 : vector<16x1xf32>
      %19 = vector.broadcast %18 : vector<16x1xf32> to vector<16x128xf32>
      %20 = arith.mulf %12, %19 : vector<16x128xf32>
      %c0_12 = arith.constant 0 : index
      %c0_13 = arith.constant 0 : index
      %21 = vector.load %arg5[%c0_12, %c0_13] : memref<16x128xf32, #tpu.memory_space<vmem>>, vector<16x128xf32>
      tpu.vector_store %arg5[%c0_12, %c0_13], %20 {strides = array<i32>} : memref<16x128xf32, #tpu.memory_space<vmem>>, vector<16x128xf32>,
    } else {
    }
    return
  }
  func.func @transform_0(%arg0: i32, %arg1: i32) -> (i32, i32) {
    %c0_i32 = arith.constant 0 : i32
    return %arg0, %arg1 : i32, i32
  }
  func.func @transform_1(%arg0: i32, %arg1: i32) -> (i32, i32) {
    %c0_i32 = arith.constant 0 : i32
    %c0_i32_0 = arith.constant 0 : i32
    return %arg1, %c0_i32 : i32, i32
  }
  func.func @transform_2(%arg0: i32, %arg1: i32) -> (i32, i32) {
    %c0_i32 = arith.constant 0 : i32
    %c0_i32_0 = arith.constant 0 : i32
    %c0_i32_1 = arith.constant 0 : i32
    return %c0_i32, %c0_i32_0 : i32, i32
  }
  func.func @transform_3(%arg0: i32, %arg1: i32) -> (i32, i32) {
    %c0_i32 = arith.constant 0 : i32
    %c0_i32_0 = arith.constant 0 : i32
    return %arg0, %c0_i32 : i32, i32
  }
}

module attributes {stable_mosaic.version = 11 : i64} {
  func.func @_linear_norm_kernel(%arg0: i32, %arg1: i32, %arg2: memref<16x1024xbf16, #tpu.memory_space<vmem>>, %arg3: memref<1024x128xbf16, #tpu.memory_space<vmem>>, %arg4: memref<1x128xf32, #tpu.memory_space<vmem>>, %arg5: memref<16x128xf32, #tpu.memory_space<vmem>>) attributes {dimension_semantics = [#tpu.dimension_semantics<parallel>, #tpu.dimension_semantics<arbitrary>], iteration_bounds = array<i64: 1, 1>, scalar_prefetch = 0 : i64, scratch_operands = 0 : i64, tpu.core_type = #tpu.core_type<tc>, window_params = [{transform_indices = @transform_0, window_bounds = array<i64: 16, 1024>}, {transform_indices = @transform_1, window_bounds = array<i64: 1024, 128>}, {pipeline_mode = #tpu.pipeline_mode<synchronous>, transform_indices = @transform_2, window_bounds = array<i64: 1, 128>}, {transform_indices = @transform_3, window_bounds = array<i64: 16, 128>}]} {
    %c0 = arith.constant 0 : index
    %c0_0 = arith.constant 0 : index
    %0 = vector.load %arg2[%c0, %c0_0] : memref<16x1024xbf16, #tpu.memory_space<vmem>>, vector<16x1024xbf16>
    %c0_1 = arith.constant 0 : index
    %c0_2 = arith.constant 0 : index
    %1 = vector.load %arg3[%c0_1, %c0_2] : memref<1024x128xbf16, #tpu.memory_space<vmem>>, vector<1024x128xbf16>
    %cst = arith.constant dense<0.000000e+00> : vector<16x128xf32>
    %2 = tpu.matmul %0, %1, %cst {dimension_numbers = #tpu.dot_dimension_numbers<[1], [0], [0], [1], [0, 0, 1, 1], [], []>} : vector<16x1024xbf16>, vector<1024x128xbf16>, vector<16x128xf32> -> vector<16x128xf32>
    %c0_i32 = arith.constant 0 : i32
    %3 = arith.cmpi eq, %arg1, %c0_i32 : i32
    %4 = arith.extui %3 : i1 to i32
    %c0_i32_3 = arith.constant 0 : i32
    %5 = arith.cmpi ne, %4, %c0_i32_3 : i32
    scf.if %5 {
      %c0_8 = arith.constant 0 : index
      %c0_9 = arith.constant 0 : index
      %12 = vector.load %arg4[%c0_8, %c0_9] : memref<1x128xf32, #tpu.memory_space<vmem>>, vector<1x128xf32>
      %13 = vector.broadcast %12 : vector<1x128xf32> to vector<16x128xf32>
      %14 = arith.addf %13, %2 : vector<16x128xf32>
      %c0_10 = arith.constant 0 : index
      %c0_11 = arith.constant 0 : index
      %15 = vector.load %arg5[%c0_10, %c0_11] : memref<16x128xf32, #tpu.memory_space<vmem>>, vector<16x128xf32>
      tpu.vector_store %arg5[%c0_10, %c0_11], %14 {strides = array<i32>} : memref<16x128xf32, #tpu.memory_space<vmem>>, vector<16x128xf32>,
    } else {
    }
    %c0_i32_4 = arith.constant 0 : i32
    %6 = arith.cmpi ne, %arg1, %c0_i32_4 : i32
    %7 = arith.extui %6 : i1 to i32
    %c0_i32_5 = arith.constant 0 : i32
    %8 = arith.cmpi ne, %7, %c0_i32_5 : i32
    scf.if %8 {
      %c0_8 = arith.constant 0 : index
      %c0_9 = arith.constant 0 : index
      %12 = vector.load %arg5[%c0_8, %c0_9] : memref<16x128xf32, #tpu.memory_space<vmem>>, vector<16x128xf32>
      %13 = arith.addf %12, %2 : vector<16x128xf32>
      %c0_10 = arith.constant 0 : index
      %c0_11 = arith.constant 0 : index
      %14 = vector.load %arg5[%c0_10, %c0_11] : memref<16x128xf32, #tpu.memory_space<vmem>>, vector<16x128xf32>
      tpu.vector_store %arg5[%c0_10, %c0_11], %13 {strides = array<i32>} : memref<16x128xf32, #tpu.memory_space<vmem>>, vector<16x128xf32>,
    } else {
    }
    %c0_i32_6 = arith.constant 0 : i32
    %9 = arith.cmpi eq, %arg1, %c0_i32_6 : i32
    %10 = arith.extui %9 : i1 to i32
    %c0_i32_7 = arith.constant 0 : i32
    %11 = arith.cmpi ne, %10, %c0_i32_7 : i32
    scf.if %11 {
      %c0_8 = arith.constant 0 : index
      %c0_9 = arith.constant 0 : index
      %12 = vector.load %arg5[%c0_8, %c0_9] : memref<16x128xf32, #tpu.memory_space<vmem>>, vector<16x128xf32>
      %13 = arith.mulf %12, %12 : vector<16x128xf32>
      %cst_10 = arith.constant dense<0.000000e+00> : vector<16xf32>
      %14 = vector.multi_reduction <add>, %13, %cst_10 [1] : vector<16x128xf32> to vector<16xf32>
      %15 = vector.shape_cast %14 : vector<16xf32> to vector<16x1xf32>
      %cst_11 = arith.constant 1.000000e-24 : f32
      %16 = vector.broadcast %cst_11 : f32 to vector<16x1xf32>
      %17 = arith.maximumf %15, %16 : vector<16x1xf32>
      %18 = math.rsqrt %17 : vector<16x1xf32>
      %19 = vector.broadcast %18 : vector<16x1xf32> to vector<16x128xf32>
      %20 = arith.mulf %12, %19 : vector<16x128xf32>
      %c0_12 = arith.constant 0 : index
      %c0_13 = arith.constant 0 : index
      %21 = vector.load %arg5[%c0_12, %c0_13] : memref<16x128xf32, #tpu.memory_space<vmem>>, vector<16x128xf32>
      tpu.vector_store %arg5[%c0_12, %c0_13], %20 {strides = array<i32>} : memref<16x128xf32, #tpu.memory_space<vmem>>, vector<16x128xf32>,
    } else {
    }
    return
  }
  func.func @transform_0(%arg0: i32, %arg1: i32) -> (i32, i32) {
    %c0_i32 = arith.constant 0 : i32
    return %arg0, %arg1 : i32, i32
  }
  func.func @transform_1(%arg0: i32, %arg1: i32) -> (i32, i32) {
    %c0_i32 = arith.constant 0 : i32
    %c0_i32_0 = arith.constant 0 : i32
    return %arg1, %c0_i32 : i32, i32
  }
  func.func @transform_2(%arg0: i32, %arg1: i32) -> (i32, i32) {
    %c0_i32 = arith.constant 0 : i32
    %c0_i32_0 = arith.constant 0 : i32
    %c0_i32_1 = arith.constant 0 : i32
    return %c0_i32, %c0_i32_0 : i32, i32
  }
  func.func @transform_3(%arg0: i32, %arg1: i32) -> (i32, i32) {
    %c0_i32 = arith.constant 0 : i32
    %c0_i32_0 = arith.constant 0 : i32
    return %arg0, %c0_i32 : i32, i32
  }
}

module attributes {stable_mosaic.version = 11 : i64} {
  func.func @_triplet_hinge_kernel(%arg0: i32, %arg1: memref<16x128xf32, #tpu.memory_space<vmem>>, %arg2: memref<16x128xf32, #tpu.memory_space<vmem>>, %arg3: memref<128x128xf32, #tpu.memory_space<vmem>>, %arg4: memref<16x128xf32, #tpu.memory_space<vmem>>) attributes {dimension_semantics = [#tpu.dimension_semantics<parallel>], iteration_bounds = array<i64: 1>, scalar_prefetch = 0 : i64, scratch_operands = 0 : i64, tpu.core_type = #tpu.core_type<tc>, window_params = [{pipeline_mode = #tpu.pipeline_mode<synchronous>, transform_indices = @transform_0, window_bounds = array<i64: 16, 128>}, {pipeline_mode = #tpu.pipeline_mode<synchronous>, transform_indices = @transform_1, window_bounds = array<i64: 16, 128>}, {transform_indices = @transform_2, window_bounds = array<i64: 128, 128>}, {transform_indices = @transform_3, window_bounds = array<i64: 16, 128>}]} {
    %c0 = arith.constant 0 : index
    %c0_0 = arith.constant 0 : index
    %0 = vector.load %arg1[%c0, %c0_0] : memref<16x128xf32, #tpu.memory_space<vmem>>, vector<16x128xf32>
    %c0_1 = arith.constant 0 : index
    %c0_2 = arith.constant 0 : index
    %1 = vector.load %arg2[%c0_1, %c0_2] : memref<16x128xf32, #tpu.memory_space<vmem>>, vector<16x128xf32>
    %2 = arith.mulf %0, %1 : vector<16x128xf32>
    %cst = arith.constant dense<0.000000e+00> : vector<16xf32>
    %3 = vector.multi_reduction <add>, %2, %cst [1] : vector<16x128xf32> to vector<16xf32>
    %4 = vector.shape_cast %3 : vector<16xf32> to vector<16x1xf32>
    %cst_3 = arith.constant 1.000000e+00 : f32
    %5 = vector.broadcast %cst_3 : f32 to vector<16x1xf32>
    %6 = arith.subf %5, %4 : vector<16x1xf32>
    %7 = arith.truncf %0 : vector<16x128xf32> to vector<16x128xbf16>
    %c0_4 = arith.constant 0 : index
    %c0_5 = arith.constant 0 : index
    %8 = vector.load %arg3[%c0_4, %c0_5] : memref<128x128xf32, #tpu.memory_space<vmem>>, vector<128x128xf32>
    %9 = arith.truncf %8 : vector<128x128xf32> to vector<128x128xbf16>
    %cst_6 = arith.constant dense<0.000000e+00> : vector<16x128xf32>
    %10 = tpu.matmul %7, %9, %cst_6 {dimension_numbers = #tpu.dot_dimension_numbers<[1], [1], [0], [0], [0, 0, 1, 0], [], []>} : vector<16x128xbf16>, vector<128x128xbf16>, vector<16x128xf32> -> vector<16x128xf32>
    %cst_7 = arith.constant 1.000000e+00 : f32
    %11 = vector.broadcast %cst_7 : f32 to vector<16x1xf32>
    %12 = arith.subf %6, %11 : vector<16x1xf32>
    %13 = vector.broadcast %12 : vector<16x1xf32> to vector<16x128xf32>
    %14 = arith.addf %13, %10 : vector<16x128xf32>
    %cst_8 = arith.constant 2.000000e-01 : f32
    %15 = vector.broadcast %cst_8 : f32 to vector<16x128xf32>
    %16 = arith.addf %14, %15 : vector<16x128xf32>
    %cst_9 = arith.constant 0.000000e+00 : f32
    %17 = vector.broadcast %cst_9 : f32 to vector<16x128xf32>
    %18 = arith.maximumf %16, %17 : vector<16x128xf32>
    %c0_10 = arith.constant 0 : index
    %c0_11 = arith.constant 0 : index
    %19 = vector.load %arg4[%c0_10, %c0_11] : memref<16x128xf32, #tpu.memory_space<vmem>>, vector<16x128xf32>
    tpu.vector_store %arg4[%c0_10, %c0_11], %18 {strides = array<i32>} : memref<16x128xf32, #tpu.memory_space<vmem>>, vector<16x128xf32>,
    return
  }
  func.func @transform_0(%arg0: i32) -> (i32, i32) {
    %c0_i32 = arith.constant 0 : i32
    %c0_i32_0 = arith.constant 0 : i32
    %c0_i32_1 = arith.constant 0 : i32
    return %c0_i32, %c0_i32_0 : i32, i32
  }
  func.func @transform_1(%arg0: i32) -> (i32, i32) {
    %c0_i32 = arith.constant 0 : i32
    %c0_i32_0 = arith.constant 0 : i32
    %c0_i32_1 = arith.constant 0 : i32
    return %c0_i32, %c0_i32_0 : i32, i32
  }
  func.func @transform_2(%arg0: i32) -> (i32, i32) {
    %c0_i32 = arith.constant 0 : i32
    %c0_i32_0 = arith.constant 0 : i32
    return %arg0, %c0_i32 : i32, i32
  }
  func.func @transform_3(%arg0: i32) -> (i32, i32) {
    %c0_i32 = arith.constant 0 : i32
    %c0_i32_0 = arith.constant 0 : i32
    return %c0_i32, %arg0 : i32, i32
  }
}

</mosaic_0001>

<llo_original>
// kernel: triplet_forward.3
$region0: #{triplet_forward.3}
  #allocation0 [shape = 'u32[]', space=smem, size = 0x4, offset = 0x4, fixed_abs, tag = 'smem constant byte address 0x4 - core index']
  #allocation1 [shape = 'u32[144,128]{1,0:T(1,128)}', space=vmem, size = 0x12000, scoped, tag = 'internal scratch']
  %s0 = inlined_call_operand.vmem [shape: bf16[16,128], index: 0, kind: input, shape index: {}]
  %s1 = inlined_call_operand.vmem [shape: bf16[128,128], index: 1, kind: input, shape index: {}]
  %s2 = inlined_call_operand.vmem [shape: f32[1,128], index: 2, kind: input, shape index: {}]
  %s3 = inlined_call_operand.vmem [shape: f32[16,128], index: 3, kind: output, shape index: {}]
  %s4 = sld [smem:[#allocation0]]
  $region34: #{triplet_forward.3} parent=0
    _
  %s6 = ssub.s32 1, %s4
  %s7 = scalar_select 0, %s6, %s4
  // Predicated region
  $region2: #{triplet_forward.3} parent=0 // pred_check
    _
  $region3: #{triplet_forward.3} parent=0 // pred_check_branch
    %9 = sbr.rel (0) target = $region5
  $region4: #{triplet_forward.3} parent=0 // pred_region
    _
  $region5: #{triplet_forward.3} parent=0 // pred_fallthru
    _
  // Predicated region
  $region6: #{triplet_forward.3} parent=0 // pred_check
    _
  $region7: #{triplet_forward.3} parent=0 // pred_check_branch
    %11 = sbr.rel (0) target = $region9
  $region8: #{triplet_forward.3} parent=0 // pred_region
    _
  $region9: #{triplet_forward.3} parent=0 // pred_fallthru
    _
  // Predicated region
  $region10: #{triplet_forward.3} parent=0 // pred_check
    _
  $region11: #{triplet_forward.3} parent=0 // pred_check_branch
    %13 = sbr.rel (0) target = $region13
  $region12: #{triplet_forward.3} parent=0 // pred_region
    _
  $region13: #{triplet_forward.3} parent=0 // pred_fallthru
    _
  %v15 = vld [vmem:[%s0] sm:$0xf]
  %v16 = vld [vmem:[%s0 + $0x4] sm:$0xf]
  %v17 = vld [vmem:[%s1] sm:$0xf]
  %v18 = vld [vmem:[%s1 + $0x4] sm:$0xf]
  %v19 = vld [vmem:[%s1 + $0x8] sm:$0xf]
  %v20 = vld [vmem:[%s1 + $0xc] sm:$0xf]
  %v21 = vld [vmem:[%s1 + $0x10] sm:$0xf]
  %v22 = vld [vmem:[%s1 + $0x14] sm:$0xf]
  %v23 = vld [vmem:[%s1 + $0x18] sm:$0xf]
  %v24 = vld [vmem:[%s1 + $0x1c] sm:$0xf]
  %v25 = vld [vmem:[%s1 + $0x20] sm:$0xf]
  %v26 = vld [vmem:[%s1 + $0x24] sm:$0xf]
  %v27 = vld [vmem:[%s1 + $0x28] sm:$0xf]
  %v28 = vld [vmem:[%s1 + $0x2c] sm:$0xf]
  %v29 = vld [vmem:[%s1 + $0x30] sm:$0xf]
  %v30 = vld [vmem:[%s1 + $0x34] sm:$0xf]
  %v31 = vld [vmem:[%s1 + $0x38] sm:$0xf]
  %v32 = vld [vmem:[%s1 + $0x3c] sm:$0xf]
  %v35 = vunpack.c.l.b16 %v15
  %v36 = vunpack.c.l.b16 %v16
  %v37 = vpack.c.b16 %v36, %v35
  %v55 = vunpack.c.l.b16 %v17
  %v56 = vunpack.c.l.b16 %v18
  %v57 = vunpack.c.l.b16 %v19
  %v58 = vunpack.c.l.b16 %v20
  %v59 = vunpack.c.l.b16 %v21
  %v60 = vunpack.c.l.b16 %v22
  %v61 = vunpack.c.l.b16 %v23
  %v62 = vunpack.c.l.b16 %v24
  %v63 = vunpack.c.l.b16 %v25
  %v64 = vunpack.c.l.b16 %v26
  %v65 = vunpack.c.l.b16 %v27
  %v66 = vunpack.c.l.b16 %v28
  %v67 = vunpack.c.l.b16 %v29
  %v68 = vunpack.c.l.b16 %v30
  %v69 = vunpack.c.l.b16 %v31
  %v70 = vunpack.c.l.b16 %v32
  %v71 = vpack.c.b16 %v56, %v55
  %v72 = vpack.c.b16 %v58, %v57
  %v73 = vpack.c.b16 %v60, %v59
  %v74 = vpack.c.b16 %v62, %v61
  %v75 = vpack.c.b16 %v64, %v63
  %v76 = vpack.c.b16 %v66, %v65
  %v77 = vpack.c.b16 %v68, %v67
  %v78 = vpack.c.b16 %v70, %v69
  %87 = vmatprep.subr.bf16.mxu0 0
  %88 = vmatpush1.bf16.msra.mxu0 %v71
  %89 = vmatprep.subr.bf16.mxu0 0
  %90 = vmatpush1.bf16.msra.mxu0 %v72
  %91 = vmatprep.subr.bf16.mxu0 0
  %92 = vmatpush1.bf16.msra.mxu0 %v73
  %93 = vmatprep.subr.bf16.mxu0 0
  %94 = vmatpush1.bf16.msra.mxu0 %v74
  %95 = vmatprep.subr.bf16.mxu0 0
  %96 = vmatpush1.bf16.msra.mxu0 %v75
  %97 = vmatprep.subr.bf16.mxu0 0
  %98 = vmatpush1.bf16.msra.mxu0 %v76
  %99 = vmatprep.subr.bf16.mxu0 0
  %100 = vmatpush1.bf16.msra.mxu0 %v77
  %101 = vmatprep.subr.bf16.mxu0 0
  %102 = vmatpush1.bf16.msra.mxu0 %v78
  %103 = vmatprep.subr.bf16.mxu0 0
  %104 = vmatpush1.bf16.msra.mxu0 0
  %105 = vmatprep.subr.bf16.mxu0 0
  %106 = vmatpush1.bf16.msra.mxu0 0
  %107 = vmatprep.subr.bf16.mxu0 0
  %108 = vmatpush1.bf16.msra.mxu0 0
  %109 = vmatprep.subr.bf16.mxu0 0
  %110 = vmatpush1.bf16.msra.mxu0 0
  %111 = vmatprep.subr.bf16.mxu0 0
  %112 = vmatpush1.bf16.msra.mxu0 0
  %113 = vmatprep.subr.bf16.mxu0 0
  %114 = vmatpush1.bf16.msra.mxu0 0
  %115 = vmatprep.subr.bf16.mxu0 0
  %116 = vmatpush1.bf16.msra.mxu0 0
  %117 = vmatprep.subr.bf16.mxu0 0
  %118 = vmatpush1.bf16.msra.mxu0 0
  %119 = vmatprep.mubr.bf16.mxu0 0
  %120 = vmatmul.mubr.bf16.gmra.mrb[0].mxu0 %v37
  %v121 = vpop.f32.mrb[0].mxu0
  %v122 = vadd.f32 0.0, %v121
  %v123 = vpop.f32.mrb[0].mxu0
  %v124 = vpop.f32.mrb[0].mxu0
  %v125 = vadd.f32 0.0, %v124
  %v126 = vpop.f32.mrb[0].mxu0
  %127 = vdwg.mxu0
  %p128 = scmp.eq.s32.totalorder 0, 0
  // Predicated region
  $region14: #{triplet_forward.3} parent=0 // pred_check
    %p129 = pneg %p128
  $region15: #{triplet_forward.3} parent=0 // pred_check_branch
    %131 = sbr.rel (%p129) target = $region17
  $region16: #{triplet_forward.3} parent=0 // pred_region
    %v132 = vld [vmem:[%s2] sm:$0x1]
    %v134 = vlaneseq
    %v135 = vshrl.u32 %v134, 7
    %v136 = vsub.s32 0, %v135
    %v137 = vrot.slane %v132, %v136
    %v139 = vadd.f32 %v137, %v122
    %v140 = vadd.f32 %v137, %v125
    %141 = vst [vmem:[%s3] sm:$0xff] %v139
    %142 = vst [vmem:[%s3 + $0x8] sm:$0xff] %v140
  $region17: #{triplet_forward.3} parent=0 // pred_fallthru
    _
  %p143 = scmp.ne.s32.totalorder 0, 0
  // Predicated region
  $region18: #{triplet_forward.3} parent=0 // pred_check
    %p144 = pneg %p143
  $region19: #{triplet_forward.3} parent=0 // pred_check_branch
    %146 = sbr.rel (%p144) target = $region21
  $region20: #{triplet_forward.3} parent=0 // pred_region
    %v147 = vld [vmem:[%s3] sm:$0xff]
    %v148 = vld [vmem:[%s3 + $0x8] sm:$0xff]
    %v149 = vadd.f32 %v147, %v122
    %v150 = vadd.f32 %v148, %v125
    %151 = vst [vmem:[%s3] sm:$0xff] %v149
    %152 = vst [vmem:[%s3 + $0x8] sm:$0xff] %v150
  $region21: #{triplet_forward.3} parent=0 // pred_fallthru
    _
  // Predicated region
  $region22: #{triplet_forward.3} parent=0 // pred_check
    %p153 = pneg %p128
  $region23: #{triplet_forward.3} parent=0 // pred_check_branch
    %155 = sbr.rel (%p153) target = $region25
  $region24: #{triplet_forward.3} parent=0 // pred_region
    %v156 = vld [vmem:[%s3] sm:$0xff]
    %v157 = vld [vmem:[%s3 + $0x8] sm:$0xff]
    %v158 = vmul.f32 %v156, %v156
    %v159 = vmul.f32 %v157, %v157
    %160 = vadd.xlane.f32.xlu0 %v158
    %v161 = vpop.xlane.xlu0 %160
    %162 = vadd.xlane.f32.xlu0 %v159
    %v163 = vpop.xlane.xlu0 %162
    %v164 = vmax.f32 %v161, 1e-24
    %v165 = vmax.f32 %v163, 1e-24
    %v166 = vrsqrt.pop %v164
    %v167 = vrsqrt.pop %v165
    %v168 = vmul.f32 %v156, %v166
    %v169 = vmul.f32 %v157, %v167
    %170 = vst [vmem:[%s3] sm:$0xff] %v168
    %171 = vst [vmem:[%s3 + $0x8] sm:$0xff] %v169
  $region25: #{triplet_forward.3} parent=0 // pred_fallthru
    _
  // Predicated region
  $region26: #{triplet_forward.3} parent=0 // pred_check
    _
  $region27: #{triplet_forward.3} parent=0 // pred_check_branch
    %173 = sbr.rel (0) target = $region29
  $region28: #{triplet_forward.3} parent=0 // pred_region
    _
  $region29: #{triplet_forward.3} parent=0 // pred_fallthru
    _
  // Predicated region
  $region30: #{triplet_forward.3} parent=0 // pred_check
    _
  $region31: #{triplet_forward.3} parent=0 // pred_check_branch
    %175 = sbr.rel (0) target = $region33
  $region32: #{triplet_forward.3} parent=0 // pred_region
    _
  $region33: #{triplet_forward.3} parent=0 // pred_fallthru
    _

// kernel: triplet_forward.5
$region0: #{triplet_forward.5}
  #allocation0 [shape = 'u32[]', space=smem, size = 0x4, offset = 0x4, fixed_abs, tag = 'smem constant byte address 0x4 - core index']
  #allocation1 [shape = 'u32[144,128]{1,0:T(1,128)}', space=vmem, size = 0x12000, scoped, tag = 'internal scratch']
  %s0 = inlined_call_operand.vmem [shape: f32[16,128], index: 0, kind: input, shape index: {}]
  %s1 = inlined_call_operand.vmem [shape: f32[16,128], index: 1, kind: input, shape index: {}]
  %s2 = inlined_call_operand.vmem [shape: f32[128,128], index: 2, kind: input, shape index: {}]
  %s3 = inlined_call_operand.vmem [shape: f32[16,128], index: 3, kind: output, shape index: {}]
  %s4 = sld [smem:[#allocation0]]
  $region22: #{triplet_forward.5} parent=0
    _
  %s6 = ssub.s32 1, %s4
  %s7 = scalar_select 0, %s6, %s4
  // Predicated region
  $region2: #{triplet_forward.5} parent=0 // pred_check
    _
  $region3: #{triplet_forward.5} parent=0 // pred_check_branch
    %9 = sbr.rel (0) target = $region5
  $region4: #{triplet_forward.5} parent=0 // pred_region
    _
  $region5: #{triplet_forward.5} parent=0 // pred_fallthru
    _
  // Predicated region
  $region6: #{triplet_forward.5} parent=0 // pred_check
    _
  $region7: #{triplet_forward.5} parent=0 // pred_check_branch
    %11 = sbr.rel (0) target = $region9
  $region8: #{triplet_forward.5} parent=0 // pred_region
    _
  $region9: #{triplet_forward.5} parent=0 // pred_fallthru
    _
  // Predicated region
  $region10: #{triplet_forward.5} parent=0 // pred_check
    _
  $region11: #{triplet_forward.5} parent=0 // pred_check_branch
    %13 = sbr.rel (0) target = $region13
  $region12: #{triplet_forward.5} parent=0 // pred_region
    _
  $region13: #{triplet_forward.5} parent=0 // pred_fallthru
    _
  %v15 = vld [vmem:[%s0] sm:$0xff]
  %v16 = vld [vmem:[%s0 + $0x8] sm:$0xff]
  %v17 = vld [vmem:[%s1] sm:$0xff]
  %v18 = vld [vmem:[%s1 + $0x8] sm:$0xff]
  %v19 = vmul.f32 %v15, %v17
  %v20 = vmul.f32 %v16, %v18
  %21 = vadd.xlane.f32.xlu0 %v19
  %v22 = vpop.xlane.xlu0 %21
  %23 = vadd.xlane.f32.xlu0 %v20
  %v24 = vpop.xlane.xlu0 %23
  %v25 = vsub.f32 1.0, %v22
  %v26 = vsub.f32 1.0, %v24
  %v27 = vpack.c.bf16 %v16, %v15
  %v28 = vld [vmem:[%s2] sm:$0xff]
  %v29 = vld [vmem:[%s2 + $0x8] sm:$0xff]
  %v30 = vld [vmem:[%s2 + $0x10] sm:$0xff]
  %v31 = vld [vmem:[%s2 + $0x18] sm:$0xff]
  %v32 = vld [vmem:[%s2 + $0x20] sm:$0xff]
  %v33 = vld [vmem:[%s2 + $0x28] sm:$0xff]
  %v34 = vld [vmem:[%s2 + $0x30] sm:$0xff]
  %v35 = vld [vmem:[%s2 + $0x38] sm:$0xff]
  %v36 = vld [vmem:[%s2 + $0x40] sm:$0xff]
  %v37 = vld [vmem:[%s2 + $0x48] sm:$0xff]
  %v38 = vld [vmem:[%s2 + $0x50] sm:$0xff]
  %v39 = vld [vmem:[%s2 + $0x58] sm:$0xff]
  %v40 = vld [vmem:[%s2 + $0x60] sm:$0xff]
  %v41 = vld [vmem:[%s2 + $0x68] sm:$0xff]
  %v42 = vld [vmem:[%s2 + $0x70] sm:$0xff]
  %v43 = vld [vmem:[%s2 + $0x78] sm:$0xff]
  %v44 = vpack.c.bf16 %v29, %v28
  %v45 = vpack.c.bf16 %v31, %v30
  %v46 = vpack.c.bf16 %v33, %v32
  %v47 = vpack.c.bf16 %v35, %v34
  %v48 = vpack.c.bf16 %v37, %v36
  %v49 = vpack.c.bf16 %v39, %v38
  %v50 = vpack.c.bf16 %v41, %v40
  %v51 = vpack.c.bf16 %v43, %v42
  %52 = vmatprep.subr.bf16.mxu0 0
  %53 = vmatpush1.bf16.xpose.msra.mxu0 %v44
  %54 = vmatprep.subr.bf16.mxu0 0
  %55 = vmatpush1.bf16.xpose.msra.mxu0 %v45
  %56 = vmatprep.subr.bf16.mxu0 0
  %57 = vmatpush1.bf16.xpose.msra.mxu0 %v46
  %58 = vmatprep.subr.bf16.mxu0 0
  %59 = vmatpush1.bf16.xpose.msra.mxu0 %v47
  %60 = vmatprep.subr.bf16.mxu0 0
  %61 = vmatpush1.bf16.xpose.msra.mxu0 %v48
  %62 = vmatprep.subr.bf16.mxu0 0
  %63 = vmatpush1.bf16.xpose.msra.mxu0 %v49
  %64 = vmatprep.subr.bf16.mxu0 0
  %65 = vmatpush1.bf16.xpose.msra.mxu0 %v50
  %66 = vmatprep.subr.bf16.mxu0 0
  %67 = vmatpush1.bf16.xpose.msra.mxu0 %v51
  %68 = vmatprep.subr.bf16.mxu0 0
  %69 = vmatpush1.bf16.xpose.msra.mxu0 0
  %70 = vmatprep.subr.bf16.mxu0 0
  %71 = vmatpush1.bf16.xpose.msra.mxu0 0
  %72 = vmatprep.subr.bf16.mxu0 0
  %73 = vmatpush1.bf16.xpose.msra.mxu0 0
  %74 = vmatprep.subr.bf16.mxu0 0
  %75 = vmatpush1.bf16.xpose.msra.mxu0 0
  %76 = vmatprep.subr.bf16.mxu0 0
  %77 = vmatpush1.bf16.xpose.msra.mxu0 0
  %78 = vmatprep.subr.bf16.mxu0 0
  %79 = vmatpush1.bf16.xpose.msra.mxu0 0
  %80 = vmatprep.subr.bf16.mxu0 0
  %81 = vmatpush1.bf16.xpose.msra.mxu0 0
  %82 = vmatprep.subr.bf16.mxu0 0
  %83 = vmatpush1.bf16.xpose.msra.mxu0 0
  %84 = vmatprep.mubr.bf16.mxu0 0
  %85 = vmatmul.mubr.bf16.gmra.mrb[0].mxu0 %v27
  %v86 = vpop.f32.mrb[0].mxu0
  %v87 = vadd.f32 0.0, %v86
  %v88 = vpop.f32.mrb[0].mxu0
  %v89 = vpop.f32.mrb[0].mxu0
  %v90 = vadd.f32 0.0, %v89
  %v91 = vpop.f32.mrb[0].mxu0
  %92 = vdwg.mxu0
  %v93 = vsub.f32 %v25, 1.0
  %v94 = vsub.f32 %v26, 1.0
  %v95 = vadd.f32 %v93, %v87
  %v96 = vadd.f32 %v94, %v90
  %v97 = vadd.f32 %v95, 0.2
  %v98 = vadd.f32 %v96, 0.2
  %v99 = vmax.f32 %v97, 0.0
  %v100 = vmax.f32 %v98, 0.0
  %101 = vst [vmem:[%s3] sm:$0xff] %v99
  %102 = vst [vmem:[%s3 + $0x8] sm:$0xff] %v100
  // Predicated region
  $region14: #{triplet_forward.5} parent=0 // pred_check
    _
  $region15: #{triplet_forward.5} parent=0 // pred_check_branch
    %104 = sbr.rel (0) target = $region17
  $region16: #{triplet_forward.5} parent=0 // pred_region
    _
  $region17: #{triplet_forward.5} parent=0 // pred_fallthru
    _
  // Predicated region
  $region18: #{triplet_forward.5} parent=0 // pred_check
    _
  $region19: #{triplet_forward.5} parent=0 // pred_check_branch
    %106 = sbr.rel (0) target = $region21
  $region20: #{triplet_forward.5} parent=0 // pred_region
    _
  $region21: #{triplet_forward.5} parent=0 // pred_fallthru
    _

// kernel: triplet_forward.4
$region0: #{triplet_forward.4}
  #allocation0 [shape = 'u32[]', space=smem, size = 0x4, offset = 0x4, fixed_abs, tag = 'smem constant byte address 0x4 - core index']
  #allocation1 [shape = 'u32[144,128]{1,0:T(1,128)}', space=vmem, size = 0x12000, scoped, tag = 'internal scratch']
  %s0 = inlined_call_operand.vmem [shape: bf16[16,1024], index: 0, kind: input, shape index: {}]
  %s1 = inlined_call_operand.vmem [shape: bf16[1024,128], index: 1, kind: input, shape index: {}]
  %s2 = inlined_call_operand.vmem [shape: f32[1,128], index: 2, kind: input, shape index: {}]
  %s3 = inlined_call_operand.vmem [shape: f32[16,128], index: 3, kind: output, shape index: {}]
  %s4 = sld [smem:[#allocation0]]
  $region34: #{triplet_forward.4} parent=0
    _
  %s6 = ssub.s32 1, %s4
  %s7 = scalar_select 0, %s6, %s4
  // Predicated region
  $region2: #{triplet_forward.4} parent=0 // pred_check
    _
  $region3: #{triplet_forward.4} parent=0 // pred_check_branch
    %9 = sbr.rel (0) target = $region5
  $region4: #{triplet_forward.4} parent=0 // pred_region
    _
  $region5: #{triplet_forward.4} parent=0 // pred_fallthru
    _
  // Predicated region
  $region6: #{triplet_forward.4} parent=0 // pred_check
    _
  $region7: #{triplet_forward.4} parent=0 // pred_check_branch
    %11 = sbr.rel (0) target = $region9
  $region8: #{triplet_forward.4} parent=0 // pred_region
    _
  $region9: #{triplet_forward.4} parent=0 // pred_fallthru
    _
  // Predicated region
  $region10: #{triplet_forward.4} parent=0 // pred_check
    _
  $region11: #{triplet_forward.4} parent=0 // pred_check_branch
    %13 = sbr.rel (0) target = $region13
  $region12: #{triplet_forward.4} parent=0 // pred_region
    _
  $region13: #{triplet_forward.4} parent=0 // pred_fallthru
    _
  %v15 = vld [vmem:[%s0] sm:$0xff]
  %v16 = vld [vmem:[%s0 + $0x8] sm:$0xff]
  %v17 = vld [vmem:[%s0 + $0x10] sm:$0xff]
  %v18 = vld [vmem:[%s0 + $0x18] sm:$0xff]
  %v19 = vld [vmem:[%s0 + $0x20] sm:$0xff]
  %v20 = vld [vmem:[%s0 + $0x28] sm:$0xff]
  %v21 = vld [vmem:[%s0 + $0x30] sm:$0xff]
  %v22 = vld [vmem:[%s0 + $0x38] sm:$0xff]
  %v23 = vld [vmem:[%s1] sm:$0xf]
  %v24 = vld [vmem:[%s1 + $0x4] sm:$0xf]
  %v25 = vld [vmem:[%s1 + $0x8] sm:$0xf]
  %v26 = vld [vmem:[%s1 + $0xc] sm:$0xf]
  %v27 = vld [vmem:[%s1 + $0x10] sm:$0xf]
  %v28 = vld [vmem:[%s1 + $0x14] sm:$0xf]
  %v29 = vld [vmem:[%s1 + $0x18] sm:$0xf]
  %v30 = vld [vmem:[%s1 + $0x1c] sm:$0xf]
  %v31 = vld [vmem:[%s1 + $0x20] sm:$0xf]
  %v32 = vld [vmem:[%s1 + $0x24] sm:$0xf]
  %v33 = vld [vmem:[%s1 + $0x28] sm:$0xf]
  %v34 = vld [vmem:[%s1 + $0x2c] sm:$0xf]
  %v35 = vld [vmem:[%s1 + $0x30] sm:$0xf]
  %v36 = vld [vmem:[%s1 + $0x34] sm:$0xf]
  %v37 = vld [vmem:[%s1 + $0x38] sm:$0xf]
  %v38 = vld [vmem:[%s1 + $0x3c] sm:$0xf]
  %v39 = vld [vmem:[%s1 + $0x40] sm:$0xf]
  %v40 = vld [vmem:[%s1 + $0x44] sm:$0xf]
  %v41 = vld [vmem:[%s1 + $0x48] sm:$0xf]
  %v42 = vld [vmem:[%s1 + $0x4c] sm:$0xf]
  %v43 = vld [vmem:[%s1 + $0x50] sm:$0xf]
  %v44 = vld [vmem:[%s1 + $0x54] sm:$0xf]
  %v45 = vld [vmem:[%s1 + $0x58] sm:$0xf]
  %v46 = vld [vmem:[%s1 + $0x5c] sm:$0xf]
  %v47 = vld [vmem:[%s1 + $0x60] sm:$0xf]
  %v48 = vld [vmem:[%s1 + $0x64] sm:$0xf]
  %v49 = vld [vmem:[%s1 + $0x68] sm:$0xf]
  %v50 = vld [vmem:[%s1 + $0x6c] sm:$0xf]
  %v51 = vld [vmem:[%s1 + $0x70] sm:$0xf]
  %v52 = vld [vmem:[%s1 + $0x74] sm:$0xf]
  %v53 = vld [vmem:[%s1 + $0x78] sm:$0xf]
  %v54 = vld [vmem:[%s1 + $0x7c] sm:$0xf]
  %v55 = vld [vmem:[%s1 + $0x80] sm:$0xf]
  %v56 = vld [vmem:[%s1 + $0x84] sm:$0xf]
  %v57 = vld [vmem:[%s1 + $0x88] sm:$0xf]
  %v58 = vld [vmem:[%s1 + $0x8c] sm:$0xf]
  %v59 = vld [vmem:[%s1 + $0x90] sm:$0xf]
  %v60 = vld [vmem:[%s1 + $0x94] sm:$0xf]
  %v61 = vld [vmem:[%s1 + $0x98] sm:$0xf]
  %v62 = vld [vmem:[%s1 + $0x9c] sm:$0xf]
  %v63 = vld [vmem:[%s1 + $0xa0] sm:$0xf]
  %v64 = vld [vmem:[%s1 + $0xa4] sm:$0xf]
  %v65 = vld [vmem:[%s1 + $0xa8] sm:$0xf]
  %v66 = vld [vmem:[%s1 + $0xac] sm:$0xf]
  %v67 = vld [vmem:[%s1 + $0xb0] sm:$0xf]
  %v68 = vld [vmem:[%s1 + $0xb4] sm:$0xf]
  %v69 = vld [vmem:[%s1 + $0xb8] sm:$0xf]
  %v70 = vld [vmem:[%s1 + $0xbc] sm:$0xf]
  %v71 = vld [vmem:[%s1 + $0xc0] sm:$0xf]
  %v72 = vld [vmem:[%s1 + $0xc4] sm:$0xf]
  %v73 = vld [vmem:[%s1 + $0xc8] sm:$0xf]
  %v74 = vld [vmem:[%s1 + $0xcc] sm:$0xf]
  %v75 = vld [vmem:[%s1 + $0xd0] sm:$0xf]
  %v76 = vld [vmem:[%s1 + $0xd4] sm:$0xf]
  %v77 = vld [vmem:[%s1 + $0xd8] sm:$0xf]
  %v78 = vld [vmem:[%s1 + $0xdc] sm:$0xf]
  %v79 = vld [vmem:[%s1 + $0xe0] sm:$0xf]
  %v80 = vld [vmem:[%s1 + $0xe4] sm:$0xf]
  %v81 = vld [vmem:[%s1 + $0xe8] sm:$0xf]
  %v82 = vld [vmem:[%s1 + $0xec] sm:$0xf]
  %v83 = vld [vmem:[%s1 + $0xf0] sm:$0xf]
  %v84 = vld [vmem:[%s1 + $0xf4] sm:$0xf]
  %v85 = vld [vmem:[%s1 + $0xf8] sm:$0xf]
  %v86 = vld [vmem:[%s1 + $0xfc] sm:$0xf]
  %v87 = vld [vmem:[%s1 + $0x100] sm:$0xf]
  %v88 = vld [vmem:[%s1 + $0x104] sm:$0xf]
  %v89 = vld [vmem:[%s1 + $0x108] sm:$0xf]
  %v90 = vld [vmem:[%s1 + $0x10c] sm:$0xf]
  %v91 = vld [vmem:[%s1 + $0x110] sm:$0xf]
  %v92 = vld [vmem:[%s1 + $0x114] sm:$0xf]
  %v93 = vld [vmem:[%s1 + $0x118] sm:$0xf]
  %v94 = vld [vmem:[%s1 + $0x11c] sm:$0xf]
  %v95 = vld [vmem:[%s1 + $0x120] sm:$0xf]
  %v96 = vld [vmem:[%s1 + $0x124] sm:$0xf]
  %v97 = vld [vmem:[%s1 + $0x128] sm:$0xf]
  %v98 = vld [vmem:[%s1 + $0x12c] sm:$0xf]
  %v99 = vld [vmem:[%s1 + $0x130] sm:$0xf]
  %v100 = vld [vmem:[%s1 + $0x134] sm:$0xf]
  %v101 = vld [vmem:[%s1 + $0x138] sm:$0xf]
  %v102 = vld [vmem:[%s1 + $0x13c] sm:$0xf]
  %v103 = vld [vmem:[%s1 + $0x140] sm:$0xf]
  %v104 = vld [vmem:[%s1 + $0x144] sm:$0xf]
  %v105 = vld [vmem:[%s1 + $0x148] sm:$0xf]
  %v106 = vld [vmem:[%s1 + $0x14c] sm:$0xf]
  %v107 = vld [vmem:[%s1 + $0x150] sm:$0xf]
  %v108 = vld [vmem:[%s1 + $0x154] sm:$0xf]
  %v109 = vld [vmem:[%s1 + $0x158] sm:$0xf]
  %v110 = vld [vmem:[%s1 + $0x15c] sm:$0xf]
  %v111 = vld [vmem:[%s1 + $0x160] sm:$0xf]
  %v112 = vld [vmem:[%s1 + $0x164] sm:$0xf]
  %v113 = vld [vmem:[%s1 + $0x168] sm:$0xf]
  %v114 = vld [vmem:[%s1 + $0x16c] sm:$0xf]
  %v115 = vld [vmem:[%s1 + $0x170] sm:$0xf]
  %v116 = vld [vmem:[%s1 + $0x174] sm:$0xf]
  %v117 = vld [vmem:[%s1 + $0x178] sm:$0xf]
  %v118 = vld [vmem:[%s1 + $0x17c] sm:$0xf]
  %v119 = vld [vmem:[%s1 + $0x180] sm:$0xf]
  %v120 = vld [vmem:[%s1 + $0x184] sm:$0xf]
  %v121 = vld [vmem:[%s1 + $0x188] sm:$0xf]
  %v122 = vld [vmem:[%s1 + $0x18c] sm:$0xf]
  %v123 = vld [vmem:[%s1 + $0x190] sm:$0xf]
  %v124 = vld [vmem:[%s1 + $0x194] sm:$0xf]
  %v125 = vld [vmem:[%s1 + $0x198] sm:$0xf]
  %v126 = vld [vmem:[%s1 + $0x19c] sm:$0xf]
  %v127 = vld [vmem:[%s1 + $0x1a0] sm:$0xf]
  %v128 = vld [vmem:[%s1 + $0x1a4] sm:$0xf]
  %v129 = vld [vmem:[%s1 + $0x1a8] sm:$0xf]
  %v130 = vld [vmem:[%s1 + $0x1ac] sm:$0xf]
  %v131 = vld [vmem:[%s1 + $0x1b0] sm:$0xf]
  %v132 = vld [vmem:[%s1 + $0x1b4] sm:$0xf]
  %v133 = vld [vmem:[%s1 + $0x1b8] sm:$0xf]
  %v134 = vld [vmem:[%s1 + $0x1bc] sm:$0xf]
  %v135 = vld [vmem:[%s1 + $0x1c0] sm:$0xf]
  %v136 = vld [vmem:[%s1 + $0x1c4] sm:$0xf]
  %v137 = vld [vmem:[%s1 + $0x1c8] sm:$0xf]
  %v138 = vld [vmem:[%s1 + $0x1cc] sm:$0xf]
  %v139 = vld [vmem:[%s1 + $0x1d0] sm:$0xf]
  %v140 = vld [vmem:[%s1 + $0x1d4] sm:$0xf]
  %v141 = vld [vmem:[%s1 + $0x1d8] sm:$0xf]
  %v142 = vld [vmem:[%s1 + $0x1dc] sm:$0xf]
  %v143 = vld [vmem:[%s1 + $0x1e0] sm:$0xf]
  %v144 = vld [vmem:[%s1 + $0x1e4] sm:$0xf]
  %v145 = vld [vmem:[%s1 + $0x1e8] sm:$0xf]
  %v146 = vld [vmem:[%s1 + $0x1ec] sm:$0xf]
  %v147 = vld [vmem:[%s1 + $0x1f0] sm:$0xf]
  %v148 = vld [vmem:[%s1 + $0x1f4] sm:$0xf]
  %v149 = vld [vmem:[%s1 + $0x1f8] sm:$0xf]
  %v150 = vld [vmem:[%s1 + $0x1fc] sm:$0xf]
  %v159 = vunpack.c.l.b16 %v15
  %v160 = vunpack.c.h.b16 %v15
  %v161 = vunpack.c.l.b16 %v16
  %v162 = vunpack.c.h.b16 %v16
  %v163 = vunpack.c.l.b16 %v17
  %v164 = vunpack.c.h.b16 %v17
  %v165 = vunpack.c.l.b16 %v18
  %v166 = vunpack.c.h.b16 %v18
  %v167 = vunpack.c.l.b16 %v19
  %v168 = vunpack.c.h.b16 %v19
  %v169 = vunpack.c.l.b16 %v20
  %v170 = vunpack.c.h.b16 %v20
  %v171 = vunpack.c.l.b16 %v21
  %v172 = vunpack.c.h.b16 %v21
  %v173 = vunpack.c.l.b16 %v22
  %v174 = vunpack.c.h.b16 %v22
  %v175 = vpack.c.b16 %v167, %v159
  %v176 = vpack.c.b16 %v168, %v160
  %v177 = vpack.c.b16 %v169, %v161
  %v178 = vpack.c.b16 %v170, %v162
  %v179 = vpack.c.b16 %v171, %v163
  %v180 = vpack.c.b16 %v172, %v164
  %v181 = vpack.c.b16 %v173, %v165
  %v182 = vpack.c.b16 %v174, %v166
  %v319 = vunpack.c.l.b16 %v23
  %v320 = vunpack.c.l.b16 %v24
  %v321 = vunpack.c.l.b16 %v25
  %v322 = vunpack.c.l.b16 %v26
  %v323 = vunpack.c.l.b16 %v27
  %v324 = vunpack.c.l.b16 %v28
  %v325 = vunpack.c.l.b16 %v29
  %v326 = vunpack.c.l.b16 %v30
  %v327 = vunpack.c.l.b16 %v31
  %v328 = vunpack.c.l.b16 %v32
  %v329 = vunpack.c.l.b16 %v33
  %v330 = vunpack.c.l.b16 %v34
  %v331 = vunpack.c.l.b16 %v35
  %v332 = vunpack.c.l.b16 %v36
  %v333 = vunpack.c.l.b16 %v37
  %v334 = vunpack.c.l.b16 %v38
  %v335 = vunpack.c.l.b16 %v39
  %v336 = vunpack.c.l.b16 %v40
  %v337 = vunpack.c.l.b16 %v41
  %v338 = vunpack.c.l.b16 %v42
  %v339 = vunpack.c.l.b16 %v43
  %v340 = vunpack.c.l.b16 %v44
  %v341 = vunpack.c.l.b16 %v45
  %v342 = vunpack.c.l.b16 %v46
  %v343 = vunpack.c.l.b16 %v47
  %v344 = vunpack.c.l.b16 %v48
  %v345 = vunpack.c.l.b16 %v49
  %v346 = vunpack.c.l.b16 %v50
  %v347 = vunpack.c.l.b16 %v51
  %v348 = vunpack.c.l.b16 %v52
  %v349 = vunpack.c.l.b16 %v53
  %v350 = vunpack.c.l.b16 %v54
  %v351 = vunpack.c.l.b16 %v55
  %v352 = vunpack.c.l.b16 %v56
  %v353 = vunpack.c.l.b16 %v57
  %v354 = vunpack.c.l.b16 %v58
  %v355 = vunpack.c.l.b16 %v59
  %v356 = vunpack.c.l.b16 %v60
  %v357 = vunpack.c.l.b16 %v61
  %v358 = vunpack.c.l.b16 %v62
  %v359 = vunpack.c.l.b16 %v63
  %v360 = vunpack.c.l.b16 %v64
  %v361 = vunpack.c.l.b16 %v65
  %v362 = vunpack.c.l.b16 %v66
  %v363 = vunpack.c.l.b16 %v67
  %v364 = vunpack.c.l.b16 %v68
  %v365 = vunpack.c.l.b16 %v69
  %v366 = vunpack.c.l.b16 %v70
  %v367 = vunpack.c.l.b16 %v71
  %v368 = vunpack.c.l.b16 %v72
  %v369 = vunpack.c.l.b16 %v73
  %v370 = vunpack.c.l.b16 %v74
  %v371 = vunpack.c.l.b16 %v75
  %v372 = vunpack.c.l.b16 %v76
  %v373 = vunpack.c.l.b16 %v77
  %v374 = vunpack.c.l.b16 %v78
  %v375 = vunpack.c.l.b16 %v79
  %v376 = vunpack.c.l.b16 %v80
  %v377 = vunpack.c.l.b16 %v81
  %v378 = vunpack.c.l.b16 %v82
  %v379 = vunpack.c.l.b16 %v83
  %v380 = vunpack.c.l.b16 %v84
  %v381 = vunpack.c.l.b16 %v85
  %v382 = vunpack.c.l.b16 %v86
  %v383 = vunpack.c.l.b16 %v87
  %v384 = vunpack.c.l.b16 %v88
  %v385 = vunpack.c.l.b16 %v89
  %v386 = vunpack.c.l.b16 %v90
  %v387 = vunpack.c.l.b16 %v91
  %v388 = vunpack.c.l.b16 %v92
  %v389 = vunpack.c.l.b16 %v93
  %v390 = vunpack.c.l.b16 %v94
  %v391 = vunpack.c.l.b16 %v95
  %v392 = vunpack.c.l.b16 %v96
  %v393 = vunpack.c.l.b16 %v97
  %v394 = vunpack.c.l.b16 %v98
  %v395 = vunpack.c.l.b16 %v99
  %v396 = vunpack.c.l.b16 %v100
  %v397 = vunpack.c.l.b16 %v101
  %v398 = vunpack.c.l.b16 %v102
  %v399 = vunpack.c.l.b16 %v103
  %v400 = vunpack.c.l.b16 %v104
  %v401 = vunpack.c.l.b16 %v105
  %v402 = vunpack.c.l.b16 %v106
  %v403 = vunpack.c.l.b16 %v107
  %v404 = vunpack.c.l.b16 %v108
  %v405 = vunpack.c.l.b16 %v109
  %v406 = vunpack.c.l.b16 %v110
  %v407 = vunpack.c.l.b16 %v111
  %v408 = vunpack.c.l.b16 %v112
  %v409 = vunpack.c.l.b16 %v113
  %v410 = vunpack.c.l.b16 %v114
  %v411 = vunpack.c.l.b16 %v115
  %v412 = vunpack.c.l.b16 %v116
  %v413 = vunpack.c.l.b16 %v117
  %v414 = vunpack.c.l.b16 %v118
  %v415 = vunpack.c.l.b16 %v119
  %v416 = vunpack.c.l.b16 %v120
  %v417 = vunpack.c.l.b16 %v121
  %v418 = vunpack.c.l.b16 %v122
  %v419 = vunpack.c.l.b16 %v123
  %v420 = vunpack.c.l.b16 %v124
  %v421 = vunpack.c.l.b16 %v125
  %v422 = vunpack.c.l.b16 %v126
  %v423 = vunpack.c.l.b16 %v127
  %v424 = vunpack.c.l.b16 %v128
  %v425 = vunpack.c.l.b16 %v129
  %v426 = vunpack.c.l.b16 %v130
  %v427 = vunpack.c.l.b16 %v131
  %v428 = vunpack.c.l.b16 %v132
  %v429 = vunpack.c.l.b16 %v133
  %v430 = vunpack.c.l.b16 %v134
  %v431 = vunpack.c.l.b16 %v135
  %v432 = vunpack.c.l.b16 %v136
  %v433 = vunpack.c.l.b16 %v137
  %v434 = vunpack.c.l.b16 %v138
  %v435 = vunpack.c.l.b16 %v139
  %v436 = vunpack.c.l.b16 %v140
  %v437 = vunpack.c.l.b16 %v141
  %v438 = vunpack.c.l.b16 %v142
  %v439 = vunpack.c.l.b16 %v143
  %v440 = vunpack.c.l.b16 %v144
  %v441 = vunpack.c.l.b16 %v145
  %v442 = vunpack.c.l.b16 %v146
  %v443 = vunpack.c.l.b16 %v147
  %v444 = vunpack.c.l.b16 %v148
  %v445 = vunpack.c.l.b16 %v149
  %v446 = vunpack.c.l.b16 %v150
  %v447 = vpack.c.b16 %v320, %v319
  %v448 = vpack.c.b16 %v322, %v321
  %v449 = vpack.c.b16 %v324, %v323
  %v450 = vpack.c.b16 %v326, %v325
  %v451 = vpack.c.b16 %v328, %v327
  %v452 = vpack.c.b16 %v330, %v329
  %v453 = vpack.c.b16 %v332, %v331
  %v454 = vpack.c.b16 %v334, %v333
  %v455 = vpack.c.b16 %v336, %v335
  %v456 = vpack.c.b16 %v338, %v337
  %v457 = vpack.c.b16 %v340, %v339
  %v458 = vpack.c.b16 %v342, %v341
  %v459 = vpack.c.b16 %v344, %v343
  %v460 = vpack.c.b16 %v346, %v345
  %v461 = vpack.c.b16 %v348, %v347
  %v462 = vpack.c.b16 %v350, %v349
  %v463 = vpack.c.b16 %v352, %v351
  %v464 = vpack.c.b16 %v354, %v353
  %v465 = vpack.c.b16 %v356, %v355
  %v466 = vpack.c.b16 %v358, %v357
  %v467 = vpack.c.b16 %v360, %v359
  %v468 = vpack.c.b16 %v362, %v361
  %v469 = vpack.c.b16 %v364, %v363
  %v470 = vpack.c.b16 %v366, %v365
  %v471 = vpack.c.b16 %v368, %v367
  %v472 = vpack.c.b16 %v370, %v369
  %v473 = vpack.c.b16 %v372, %v371
  %v474 = vpack.c.b16 %v374, %v373
  %v475 = vpack.c.b16 %v376, %v375
  %v476 = vpack.c.b16 %v378, %v377
  %v477 = vpack.c.b16 %v380, %v379
  %v478 = vpack.c.b16 %v382, %v381
  %v479 = vpack.c.b16 %v384, %v383
  %v480 = vpack.c.b16 %v386, %v385
  %v481 = vpack.c.b16 %v388, %v387
  %v482 = vpack.c.b16 %v390, %v389
  %v483 = vpack.c.b16 %v392, %v391
  %v484 = vpack.c.b16 %v394, %v393
  %v485 = vpack.c.b16 %v396, %v395
  %v486 = vpack.c.b16 %v398, %v397
  %v487 = vpack.c.b16 %v400, %v399
  %v488 = vpack.c.b16 %v402, %v401
  %v489 = vpack.c.b16 %v404, %v403
  %v490 = vpack.c.b16 %v406, %v405
  %v491 = vpack.c.b16 %v408, %v407
  %v492 = vpack.c.b16 %v410, %v409
  %v493 = vpack.c.b16 %v412, %v411
  %v494 = vpack.c.b16 %v414, %v413
  %v495 = vpack.c.b16 %v416, %v415
  %v496 = vpack.c.b16 %v418, %v417
  %v497 = vpack.c.b16 %v420, %v419
  %v498 = vpack.c.b16 %v422, %v421
  %v499 = vpack.c.b16 %v424, %v423
  %v500 = vpack.c.b16 %v426, %v425
  %v501 = vpack.c.b16 %v428, %v427
  %v502 = vpack.c.b16 %v430, %v429
  %v503 = vpack.c.b16 %v432, %v431
  %v504 = vpack.c.b16 %v434, %v433
  %v505 = vpack.c.b16 %v436, %v435
  %v506 = vpack.c.b16 %v438, %v437
  %v507 = vpack.c.b16 %v440, %v439
  %v508 = vpack.c.b16 %v442, %v441
  %v509 = vpack.c.b16 %v444, %v443
  %v510 = vpack.c.b16 %v446, %v445
  %575 = vmatprep.subr.bf16.mxu0 0
  %576 = vmatpush1.bf16.msra.mxu0 %v447
  %577 = vmatprep.subr.bf16.mxu0 0
  %578 = vmatpush1.bf16.msra.mxu0 %v448
  %579 = vmatprep.subr.bf16.mxu0 0
  %580 = vmatpush1.bf16.msra.mxu0 %v449
  %581 = vmatprep.subr.bf16.mxu0 0
  %582 = vmatpush1.bf16.msra.mxu0 %v450
  %583 = vmatprep.subr.bf16.mxu0 0
  %584 = vmatpush1.bf16.msra.mxu0 %v451
  %585 = vmatprep.subr.bf16.mxu0 0
  %586 = vmatpush1.bf16.msra.mxu0 %v452
  %587 = vmatprep.subr.bf16.mxu0 0
  %588 = vmatpush1.bf16.msra.mxu0 %v453
  %589 = vmatprep.subr.bf16.mxu0 0
  %590 = vmatpush1.bf16.msra.mxu0 %v454
  %591 = vmatprep.subr.bf16.mxu0 0
  %592 = vmatpush1.bf16.msra.mxu0 %v455
  %593 = vmatprep.subr.bf16.mxu0 0
  %594 = vmatpush1.bf16.msra.mxu0 %v456
  %595 = vmatprep.subr.bf16.mxu0 0
  %596 = vmatpush1.bf16.msra.mxu0 %v457
  %597 = vmatprep.subr.bf16.mxu0 0
  %598 = vmatpush1.bf16.msra.mxu0 %v458
  %599 = vmatprep.subr.bf16.mxu0 0
  %600 = vmatpush1.bf16.msra.mxu0 %v459
  %601 = vmatprep.subr.bf16.mxu0 0
  %602 = vmatpush1.bf16.msra.mxu0 %v460
  %603 = vmatprep.subr.bf16.mxu0 0
  %604 = vmatpush1.bf16.msra.mxu0 %v461
  %605 = vmatprep.subr.bf16.mxu0 0
  %606 = vmatpush1.bf16.msra.mxu0 %v462
  %607 = vmatprep.mubr.bf16.mxu0 %v176
  %608 = vmatmul.mubr.bf16.gmra.mrb[0].mxu0 %v175
  %v609 = vpop.f32.mrb[0].mxu0
  %v610 = vadd.f32 0.0, %v609
  %v611 = vpop.f32.mrb[0].mxu0
  %v612 = vpop.f32.mrb[0].mxu0
  %v613 = vadd.f32 0.0, %v612
  %v614 = vpop.f32.mrb[0].mxu0
  %615 = vdwg.mxu0
  %616 = vmatprep.subr.bf16.mxu0 0
  %617 = vmatpush1.bf16.msra.mxu0 %v463
  %618 = vmatprep.subr.bf16.mxu0 0
  %619 = vmatpush1.bf16.msra.mxu0 %v464
  %620 = vmatprep.subr.bf16.mxu0 0
  %621 = vmatpush1.bf16.msra.mxu0 %v465
  %622 = vmatprep.subr.bf16.mxu0 0
  %623 = vmatpush1.bf16.msra.mxu0 %v466
  %624 = vmatprep.subr.bf16.mxu0 0
  %625 = vmatpush1.bf16.msra.mxu0 %v467
  %626 = vmatprep.subr.bf16.mxu0 0
  %627 = vmatpush1.bf16.msra.mxu0 %v468
  %628 = vmatprep.subr.bf16.mxu0 0
  %629 = vmatpush1.bf16.msra.mxu0 %v469
  %630 = vmatprep.subr.bf16.mxu0 0
  %631 = vmatpush1.bf16.msra.mxu0 %v470
  %632 = vmatprep.subr.bf16.mxu0 0
  %633 = vmatpush1.bf16.msra.mxu0 %v471
  %634 = vmatprep.subr.bf16.mxu0 0
  %635 = vmatpush1.bf16.msra.mxu0 %v472
  %636 = vmatprep.subr.bf16.mxu0 0
  %637 = vmatpush1.bf16.msra.mxu0 %v473
  %638 = vmatprep.subr.bf16.mxu0 0
  %639 = vmatpush1.bf16.msra.mxu0 %v474
  %640 = vmatprep.subr.bf16.mxu0 0
  %641 = vmatpush1.bf16.msra.mxu0 %v475
  %642 = vmatprep.subr.bf16.mxu0 0
  %643 = vmatpush1.bf16.msra.mxu0 %v476
  %644 = vmatprep.subr.bf16.mxu0 0
  %645 = vmatpush1.bf16.msra.mxu0 %v477
  %646 = vmatprep.subr.bf16.mxu0 0
  %647 = vmatpush1.bf16.msra.mxu0 %v478
  %648 = vmatprep.mubr.bf16.mxu0 %v178
  %649 = vmatmul.mubr.bf16.gmra.mrb[0].mxu0 %v177
  %v650 = vpop.f32.mrb[0].mxu0
  %v651 = vadd.f32 %v610, %v650
  %v652 = vpop.f32.mrb[0].mxu0
  %v653 = vpop.f32.mrb[0].mxu0
  %v654 = vadd.f32 %v613, %v653
  %v655 = vpop.f32.mrb[0].mxu0
  %656 = vdwg.mxu0
  %657 = vmatprep.subr.bf16.mxu0 0
  %658 = vmatpush1.bf16.msra.mxu0 %v479
  %659 = vmatprep.subr.bf16.mxu0 0
  %660 = vmatpush1.bf16.msra.mxu0 %v480
  %661 = vmatprep.subr.bf16.mxu0 0
  %662 = vmatpush1.bf16.msra.mxu0 %v481
  %663 = vmatprep.subr.bf16.mxu0 0
  %664 = vmatpush1.bf16.msra.mxu0 %v482
  %665 = vmatprep.subr.bf16.mxu0 0
  %666 = vmatpush1.bf16.msra.mxu0 %v483
  %667 = vmatprep.subr.bf16.mxu0 0
  %668 = vmatpush1.bf16.msra.mxu0 %v484
  %669 = vmatprep.subr.bf16.mxu0 0
  %670 = vmatpush1.bf16.msra.mxu0 %v485
  %671 = vmatprep.subr.bf16.mxu0 0
  %672 = vmatpush1.bf16.msra.mxu0 %v486
  %673 = vmatprep.subr.bf16.mxu0 0
  %674 = vmatpush1.bf16.msra.mxu0 %v487
  %675 = vmatprep.subr.bf16.mxu0 0
  %676 = vmatpush1.bf16.msra.mxu0 %v488
  %677 = vmatprep.subr.bf16.mxu0 0
  %678 = vmatpush1.bf16.msra.mxu0 %v489
  %679 = vmatprep.subr.bf16.mxu0 0
  %680 = vmatpush1.bf16.msra.mxu0 %v490
  %681 = vmatprep.subr.bf16.mxu0 0
  %682 = vmatpush1.bf16.msra.mxu0 %v491
  %683 = vmatprep.subr.bf16.mxu0 0
  %684 = vmatpush1.bf16.msra.mxu0 %v492
  %685 = vmatprep.subr.bf16.mxu0 0
  %686 = vmatpush1.bf16.msra.mxu0 %v493
  %687 = vmatprep.subr.bf16.mxu0 0
  %688 = vmatpush1.bf16.msra.mxu0 %v494
  %689 = vmatprep.mubr.bf16.mxu0 %v180
  %690 = vmatmul.mubr.bf16.gmra.mrb[0].mxu0 %v179
  %v691 = vpop.f32.mrb[0].mxu0
  %v692 = vadd.f32 %v651, %v691
  %v693 = vpop.f32.mrb[0].mxu0
  %v694 = vpop.f32.mrb[0].mxu0
  %v695 = vadd.f32 %v654, %v694
  %v696 = vpop.f32.mrb[0].mxu0
  %697 = vdwg.mxu0
  %698 = vmatprep.subr.bf16.mxu0 0
  %699 = vmatpush1.bf16.msra.mxu0 %v495
  %700 = vmatprep.subr.bf16.mxu0 0
  %701 = vmatpush1.bf16.msra.mxu0 %v496
  %702 = vmatprep.subr.bf16.mxu0 0
  %703 = vmatpush1.bf16.msra.mxu0 %v497
  %704 = vmatprep.subr.bf16.mxu0 0
  %705 = vmatpush1.bf16.msra.mxu0 %v498
  %706 = vmatprep.subr.bf16.mxu0 0
  %707 = vmatpush1.bf16.msra.mxu0 %v499
  %708 = vmatprep.subr.bf16.mxu0 0
  %709 = vmatpush1.bf16.msra.mxu0 %v500
  %710 = vmatprep.subr.bf16.mxu0 0
  %711 = vmatpush1.bf16.msra.mxu0 %v501
  %712 = vmatprep.subr.bf16.mxu0 0
  %713 = vmatpush1.bf16.msra.mxu0 %v502
  %714 = vmatprep.subr.bf16.mxu0 0
  %715 = vmatpush1.bf16.msra.mxu0 %v503
  %716 = vmatprep.subr.bf16.mxu0 0
  %717 = vmatpush1.bf16.msra.mxu0 %v504
  %718 = vmatprep.subr.bf16.mxu0 0
  %719 = vmatpush1.bf16.msra.mxu0 %v505
  %720 = vmatprep.subr.bf16.mxu0 0
  %721 = vmatpush1.bf16.msra.mxu0 %v506
  %722 = vmatprep.subr.bf16.mxu0 0
  %723 = vmatpush1.bf16.msra.mxu0 %v507
  %724 = vmatprep.subr.bf16.mxu0 0
  %725 = vmatpush1.bf16.msra.mxu0 %v508
  %726 = vmatprep.subr.bf16.mxu0 0
  %727 = vmatpush1.bf16.msra.mxu0 %v509
  %728 = vmatprep.subr.bf16.mxu0 0
  %729 = vmatpush1.bf16.msra.mxu0 %v510
  %730 = vmatprep.mubr.bf16.mxu0 %v182
  %731 = vmatmul.mubr.bf16.gmra.mrb[0].mxu0 %v181
  %v732 = vpop.f32.mrb[0].mxu0
  %v733 = vadd.f32 %v692, %v732
  %v734 = vpop.f32.mrb[0].mxu0
  %v735 = vpop.f32.mrb[0].mxu0
  %v736 = vadd.f32 %v695, %v735
  %v737 = vpop.f32.mrb[0].mxu0
  %738 = vdwg.mxu0
  %p739 = scmp.eq.s32.totalorder 0, 0
  // Predicated region
  $region14: #{triplet_forward.4} parent=0 // pred_check
    %p740 = pneg %p739
  $region15: #{triplet_forward.4} parent=0 // pred_check_branch
    %742 = sbr.rel (%p740) target = $region17
  $region16: #{triplet_forward.4} parent=0 // pred_region
    %v743 = vld [vmem:[%s2] sm:$0x1]
    %v745 = vlaneseq
    %v746 = vshrl.u32 %v745, 7
    %v747 = vsub.s32 0, %v746
    %v748 = vrot.slane %v743, %v747
    %v750 = vadd.f32 %v748, %v733
    %v751 = vadd.f32 %v748, %v736
    %752 = vst [vmem:[%s3] sm:$0xff] %v750
    %753 = vst [vmem:[%s3 + $0x8] sm:$0xff] %v751
  $region17: #{triplet_forward.4} parent=0 // pred_fallthru
    _
  %p754 = scmp.ne.s32.totalorder 0, 0
  // Predicated region
  $region18: #{triplet_forward.4} parent=0 // pred_check
    %p755 = pneg %p754
  $region19: #{triplet_forward.4} parent=0 // pred_check_branch
    %757 = sbr.rel (%p755) target = $region21
  $region20: #{triplet_forward.4} parent=0 // pred_region
    %v758 = vld [vmem:[%s3] sm:$0xff]
    %v759 = vld [vmem:[%s3 + $0x8] sm:$0xff]
    %v760 = vadd.f32 %v758, %v733
    %v761 = vadd.f32 %v759, %v736
    %762 = vst [vmem:[%s3] sm:$0xff] %v760
    %763 = vst [vmem:[%s3 + $0x8] sm:$0xff] %v761
  $region21: #{triplet_forward.4} parent=0 // pred_fallthru
    _
  // Predicated region
  $region22: #{triplet_forward.4} parent=0 // pred_check
    %p764 = pneg %p739
  $region23: #{triplet_forward.4} parent=0 // pred_check_branch
    %766 = sbr.rel (%p764) target = $region25
  $region24: #{triplet_forward.4} parent=0 // pred_region
    %v767 = vld [vmem:[%s3] sm:$0xff]
    %v768 = vld [vmem:[%s3 + $0x8] sm:$0xff]
    %v769 = vmul.f32 %v767, %v767
    %v770 = vmul.f32 %v768, %v768
    %771 = vadd.xlane.f32.xlu0 %v769
    %v772 = vpop.xlane.xlu0 %771
    %773 = vadd.xlane.f32.xlu0 %v770
    %v774 = vpop.xlane.xlu0 %773
    %v775 = vmax.f32 %v772, 1e-24
    %v776 = vmax.f32 %v774, 1e-24
    %v777 = vrsqrt.pop %v775
    %v778 = vrsqrt.pop %v776
    %v779 = vmul.f32 %v767, %v777
    %v780 = vmul.f32 %v768, %v778
    %781 = vst [vmem:[%s3] sm:$0xff] %v779
    %782 = vst [vmem:[%s3 + $0x8] sm:$0xff] %v780
  $region25: #{triplet_forward.4} parent=0 // pred_fallthru
    _
  // Predicated region
  $region26: #{triplet_forward.4} parent=0 // pred_check
    _
  $region27: #{triplet_forward.4} parent=0 // pred_check_branch
    %784 = sbr.rel (0) target = $region29
  $region28: #{triplet_forward.4} parent=0 // pred_region
    _
  $region29: #{triplet_forward.4} parent=0 // pred_fallthru
    _
  // Predicated region
  $region30: #{triplet_forward.4} parent=0 // pred_check
    _
  $region31: #{triplet_forward.4} parent=0 // pred_check_branch
    %786 = sbr.rel (0) target = $region33
  $region32: #{triplet_forward.4} parent=0 // pred_region
    _
  $region33: #{triplet_forward.4} parent=0 // pred_fallthru
    _

</llo_original>
